<compile_context>
chip_gen: v5e
topology: v5e:2x2
jax: 0.10.0
libtpu: 0.0.40
codegen_flags: <defaults>
</compile_context>

<pallas_src>
import functools

import jax
import jax.numpy as jnp
from jax.experimental import pallas as pl
from jax.experimental.pallas import tpu as pltpu

_BN_EPS = 1e-5
# (mid_channels, num_blocks, first_block_stride) for layer1..layer4 of ResNet-50.
BLOCK_CFG = [(64, 3, 1), (128, 4, 2), (256, 6, 2), (512, 3, 2)]
EXPANSION = 4
HIDDEN_DIM = 256


def _round_up(a, b):
    return ((a + b - 1) // b) * b


# ---------------------------------------------------------------------------
# Pallas kernels
# ---------------------------------------------------------------------------
def _mm_kernel(relu, x_ref, w_ref, b_ref, o_ref):
    """Single-shot bf16 matmul (f32 acc) + fused bias (+ ReLU)."""
    y = jnp.dot(x_ref[...], w_ref[...], preferred_element_type=jnp.float32)
    y = y + b_ref[...]
    if relu:
        y = jnp.maximum(y, 0.0)
    o_ref[...] = y.astype(o_ref.dtype)


def _mm_res_kernel(relu, x_ref, w_ref, b_ref, r_ref, o_ref):
    """Same as _mm_kernel, plus a fused residual add before the activation."""
    y = jnp.dot(x_ref[...], w_ref[...], preferred_element_type=jnp.float32)
    y = y + b_ref[...] + r_ref[...].astype(jnp.float32)
    if relu:
        y = jnp.maximum(y, 0.0)
    o_ref[...] = y.astype(o_ref.dtype)


def _maxpool_kernel(ho, x0_ref, x1_ref, x2_ref, o_ref):
    """3x3/s2 max-pool.  Inputs are the 3 W-shifted stride-2 views (N,Hp,Wo,C);
    the kernel takes their elementwise max and then does the H-direction 3-tap
    stride-2 max using only major-dim slices/reshapes."""
    w = jnp.maximum(jnp.maximum(x0_ref[...], x1_ref[...]), x2_ref[...])
    n, _, wo, c = w.shape
    res = None
    for di in range(3):
        v = w[:, di:di + 2 * ho, :, :].reshape(n, ho, 2, wo, c)[:, :, 0, :, :]
        res = v if res is None else jnp.maximum(res, v)
    o_ref[...] = res


# ---------------------------------------------------------------------------
# Pallas wrappers
# ---------------------------------------------------------------------------
def matmul_bias_act(x, wp, bias, n_out, *, relu=True, residual=None,
                    out_dtype=jnp.bfloat16):
    """y = act(x @ wp + bias [+ residual])[:, :n_out].

    x: (M, K) any float dtype (cast to bf16).
    wp: pre-packed (Kp, Np) bf16 weight (BN scale folded, zero-padded).
    bias: (1, Np) f32.
    """
    M, K = x.shape
    Kp, Np = wp.shape
    Mp = _round_up(M, 8)
    if Mp != M or Kp != K:
        x = jnp.pad(x, ((0, Mp - M), (0, Kp - K)))
    x = x.astype(jnp.bfloat16)

    tm = next(t for t in (256, 128, 64, 32, 16, 8) if Mp % t == 0)
    tn = 256 if Np % 256 == 0 else 128

    in_specs = [
        pl.BlockSpec((tm, Kp), lambda i, j: (i, 0)),
        pl.BlockSpec((Kp, tn), lambda i, j: (0, j)),
        pl.BlockSpec((1, tn), lambda i, j: (0, j)),
    ]
    args = [x, wp, bias]

    if residual is not None:
        r = residual
        if Mp != M or Np != n_out:
            r = jnp.pad(r, ((0, Mp - M), (0, Np - n_out)))
        args.append(r.astype(jnp.bfloat16))
        in_specs.append(pl.BlockSpec((tm, tn), lambda i, j: (i, j)))
        kernel = functools.partial(_mm_res_kernel, relu)
    else:
        kernel = functools.partial(_mm_kernel, relu)

    out = pl.pallas_call(
        kernel,
        out_shape=jax.ShapeDtypeStruct((Mp, Np), out_dtype),
        grid_spec=pltpu.PrefetchScalarGridSpec(
            num_scalar_prefetch=0,
            grid=(Mp // tm, Np // tn),
            in_specs=in_specs,
            out_specs=pl.BlockSpec((tm, tn), lambda i, j: (i, j)),
        ),
        compiler_params=pltpu.CompilerParams(
            dimension_semantics=("parallel", "parallel")),
    )(*args)

    if Mp != M or Np != n_out:
        out = out[:M, :n_out]
    return out


def maxpool_3x3_s2_p1(x):
    """x: (N,H,W,C) NHWC -> (N,H//2,W//2,C); kernel 3, stride 2, padding 1."""
    N, H, W, C = x.shape
    Ho, Wo = (H - 1) // 2 + 1, (W - 1) // 2 + 1
    neg = float(jnp.finfo(x.dtype).min)
    xp = jnp.pad(x, ((0, 0), (1, 1), (1, 1), (0, 0)), constant_values=neg)
    Hp = H + 2
    # Three W-shifted stride-2 views (done as cheap XLA strided slices); the
    # H-direction taps are handled inside the kernel with major-dim slicing.
    taps = [xp[:, :, j:j + 2 * Wo:2, :] for j in range(3)]

    return pl.pallas_call(
        functools.partial(_maxpool_kernel, Ho),
        out_shape=jax.ShapeDtypeStruct((N, Ho, Wo, C), x.dtype),
        grid_spec=pltpu.PrefetchScalarGridSpec(
            num_scalar_prefetch=0,
            grid=(1,),
            in_specs=[pl.BlockSpec((N, Hp, Wo, C), lambda i: (0, 0, 0, 0))] * 3,
            out_specs=pl.BlockSpec((N, Ho, Wo, C), lambda i: (0, 0, 0, 0)),
        ),
        compiler_params=pltpu.CompilerParams(
            dimension_semantics=("arbitrary",)),
    )(*taps)


# ---------------------------------------------------------------------------
# Conv-as-matmul glue (im2col) and network structure
# ---------------------------------------------------------------------------
def _im2col(x, kh, kw, stride, pad):
    """NHWC -> ((N*Ho*Wo), kh*kw*C) patches (pure slicing / concat glue)."""
    N, H, W, C = x.shape
    Ho = (H + 2 * pad - kh) // stride + 1
    Wo = (W + 2 * pad - kw) // stride + 1
    xp = jnp.pad(x, ((0, 0), (pad, pad), (pad, pad), (0, 0))) if pad else x
    cols = [xp[:, di:di + stride * Ho:stride, dj:dj + stride * Wo:stride, :]
            for di in range(kh) for dj in range(kw)]
    patches = jnp.concatenate(cols, axis=-1)            # (N, Ho, Wo, kh*kw*C)
    return patches.reshape(N * Ho * Wo, kh * kw * C), (N, Ho, Wo)


def conv_apply(x, wm, bias, *, k, stride, pad, n_out, relu, residual=None,
               out_dtype=jnp.bfloat16):
    """Conv2d with pre-packed weight `wm` (Kp,Np bf16, BN folded) + bias + act."""
    if k == 1:
        xs = x if stride == 1 else x[:, ::stride, ::stride, :]
        N, Ho, Wo, _ = xs.shape
        cols = xs.reshape(N * Ho * Wo, xs.shape[-1])
    else:
        cols, (N, Ho, Wo) = _im2col(x, k, k, stride, pad)
    res2d = (residual.reshape(cols.shape[0], n_out)
             if residual is not None else None)
    y = matmul_bias_act(cols, wm, bias, n_out, relu=relu, residual=res2d,
                        out_dtype=out_dtype)
    return y.reshape(N, Ho, Wo, n_out)


def bottleneck(x, p, mid, stride):
    out_ch = mid * EXPANSION
    if "dsw" in p:
        identity = conv_apply(x, p["dsw"], p["dsb"], k=1, stride=stride, pad=0,
                              n_out=out_ch, relu=False)
    else:
        identity = x
    out = conv_apply(x, p["w1"], p["b1"], k=1, stride=1, pad=0,
                     n_out=mid, relu=True)
    out = conv_apply(out, p["w2"], p["b2"], k=3, stride=stride, pad=1,
                     n_out=mid, relu=True)
    out = conv_apply(out, p["w3"], p["b3"], k=1, stride=1, pad=0,
                     n_out=out_ch, relu=True, residual=identity)
    return out


def res50_forward(params, x_nchw):
    x = jnp.transpose(x_nchw, (0, 2, 3, 1)).astype(jnp.bfloat16)   # -> NHWC
    x = conv_apply(x, params["conv1_w"], params["conv1_b"], k=7, stride=2,
                   pad=3, n_out=64, relu=True)
    x = maxpool_3x3_s2_p1(x)
    for li, (mid, nblocks, stride) in enumerate(BLOCK_CFG):
        for bi in range(nblocks):
            x = bottleneck(x, params["layers"][li][bi], mid,
                           stride if bi == 0 else 1)
    h = conv_apply(x, params["head_w"], params["head_b"], k=1, stride=1, pad=0,
                   n_out=HIDDEN_DIM, relu=False, out_dtype=jnp.float32)
    return jnp.transpose(h, (0, 3, 1, 2))                          # -> NCHW


# ---------------------------------------------------------------------------
# Deterministic synthetic parameters, pre-packed for the kernels
# ---------------------------------------------------------------------------
def _conv_w(key, cout, cin, k):
    fan_in = cin * k * k
    return (jax.random.normal(key, (cout, cin, k, k), jnp.float32)
            * (2.0 / fan_in) ** 0.5)


def _bn_fold(c):
    gamma = jnp.ones((c,), jnp.float32)
    beta = jnp.zeros((c,), jnp.float32)
    mean = jnp.zeros((c,), jnp.float32)
    var = jnp.ones((c,), jnp.float32)
    scale = gamma / jnp.sqrt(var + _BN_EPS)
    return scale, beta - mean * scale


def _pack(w, scale, shift):
    """(Cout,Cin,kh,kw) torch weight -> padded bf16 (Kp,Np) matmul weight + bias."""
    cout, cin, kh, kw = w.shape
    wmat = jnp.transpose(w, (2, 3, 1, 0)).reshape(kh * kw * cin, cout)
    wmat = wmat * scale[None, :]                        # fold BN scale
    K, N = wmat.shape
    Kp, Np = _round_up(K, 128), _round_up(N, 128)
    wp = jnp.pad(wmat, ((0, Kp - K), (0, Np - N))).astype(jnp.bfloat16)
    bp = jnp.pad(shift.astype(jnp.float32).reshape(1, N),
                 ((0, 0), (0, Np - N)))
    return wp, bp


def make_params(key):
    keys = iter(jax.random.split(key, 128))
    params = {}
    s, b = _bn_fold(64)
    params["conv1_w"], params["conv1_b"] = _pack(_conv_w(next(keys), 64, 3, 7),
                                                 s, b)
    in_ch = 64
    layers = []
    for mid, nblocks, _ in BLOCK_CFG:
        blocks = []
        out_ch = mid * EXPANSION
        for bi in range(nblocks):
            blk = {}
            s1, b1 = _bn_fold(mid)
            s2, b2 = _bn_fold(mid)
            s3, b3 = _bn_fold(out_ch)
            blk["w1"], blk["b1"] = _pack(_conv_w(next(keys), mid, in_ch, 1), s1, b1)
            blk["w2"], blk["b2"] = _pack(_conv_w(next(keys), mid, mid, 3), s2, b2)
            blk["w3"], blk["b3"] = _pack(_conv_w(next(keys), out_ch, mid, 1), s3, b3)
            if bi == 0:
                sd, bd = _bn_fold(out_ch)
                blk["dsw"], blk["dsb"] = _pack(_conv_w(next(keys), out_ch, in_ch, 1),
                                               sd, bd)
            blocks.append(blk)
            in_ch = out_ch
        layers.append(blocks)
    params["layers"] = layers
    head_w = _conv_w(next(keys), HIDDEN_DIM, 2048, 1)
    head_b = 0.01 * jax.random.normal(next(keys), (HIDDEN_DIM,), jnp.float32)
    params["head_w"], params["head_b"] = _pack(
        head_w, jnp.ones((HIDDEN_DIM,), jnp.float32), head_b)
    return params


if __name__ == "__main__":
    root = jax.random.PRNGKey(0)
    x_key, p_key = jax.random.split(root)

    # Small sanity check of the fused matmul kernel against plain XLA
    # (bf16 inputs, f32 accumulation on both sides).
    a = jax.random.normal(jax.random.fold_in(root, 7), (37, 53), jnp.float32)
    b = jax.random.normal(jax.random.fold_in(root, 8), (53, 19), jnp.float32)
    sc = jax.random.normal(jax.random.fold_in(root, 9), (19,), jnp.float32)
    bi = jax.random.normal(jax.random.fold_in(root, 10), (19,), jnp.float32)
    kp_t, np_t = _round_up(53, 128), _round_up(19, 128)
    wp_t = jnp.pad(b * sc[None, :], ((0, kp_t - 53), (0, np_t - 19))).astype(jnp.bfloat16)
    bp_t = jnp.pad(bi.reshape(1, 19), ((0, 0), (0, np_t - 19)))
    got = matmul_bias_act(a, wp_t, bp_t, 19, relu=True, out_dtype=jnp.float32)
    ref = jnp.maximum(
        jnp.dot(a.astype(jnp.bfloat16).astype(jnp.float32),
                (b * sc[None, :]).astype(jnp.bfloat16).astype(jnp.float32)) + bi,
        0.0)
    assert jnp.allclose(got, ref, rtol=2e-2, atol=2e-2), "matmul kernel mismatch"

    # Full res50 forward: input NCHW (2, 3, 32, 32) -> output (2, 256, 1, 1).
    x = jax.random.normal(x_key, (2, 3, 32, 32), jnp.float32)
    params = make_params(p_key)

    fwd = jax.jit(res50_forward)
    out = jax.block_until_ready(fwd(params, x))

    assert out.shape == (2, HIDDEN_DIM, 1, 1), out.shape
    assert bool(jnp.all(jnp.isfinite(out)))
    print("KERNEL_OK")
</pallas_src>

<mosaic_0001>
module attributes {stable_mosaic.version = 11 : i64} {
  func.func @_mm_kernel(%arg0: i32, %arg1: i32, %arg2: memref<8x128xbf16, #tpu.memory_space<vmem>>, %arg3: memref<128x128xbf16, #tpu.memory_space<vmem>>, %arg4: memref<1x128xf32, #tpu.memory_space<vmem>>, %arg5: memref<8x128xf32, #tpu.memory_space<vmem>>) attributes {dimension_semantics = [#tpu.dimension_semantics<parallel>, #tpu.dimension_semantics<parallel>], iteration_bounds = array<i64: 5, 1>, scalar_prefetch = 0 : i64, scratch_operands = 0 : i64, tpu.core_type = #tpu.core_type<tc>, window_params = [{transform_indices = @transform_0, window_bounds = array<i64: 8, 128>}, {transform_indices = @transform_1, window_bounds = array<i64: 128, 128>}, {transform_indices = @transform_2, window_bounds = array<i64: 1, 128>}, {transform_indices = @transform_3, window_bounds = array<i64: 8, 128>}]} {
    %c0 = arith.constant 0 : index
    %c0_0 = arith.constant 0 : index
    %0 = vector.load %arg2[%c0, %c0_0] : memref<8x128xbf16, #tpu.memory_space<vmem>>, vector<8x128xbf16>
    %c0_1 = arith.constant 0 : index
    %c0_2 = arith.constant 0 : index
    %1 = vector.load %arg3[%c0_1, %c0_2] : memref<128x128xbf16, #tpu.memory_space<vmem>>, vector<128x128xbf16>
    %cst = arith.constant dense<0.000000e+00> : vector<8x128xf32>
    %2 = tpu.matmul %0, %1, %cst {dimension_numbers = #tpu.dot_dimension_numbers<[1], [0], [0], [1], [0, 0, 1, 1], [], []>} : vector<8x128xbf16>, vector<128x128xbf16>, vector<8x128xf32> -> vector<8x128xf32>
    %c0_3 = arith.constant 0 : index
    %c0_4 = arith.constant 0 : index
    %3 = vector.load %arg4[%c0_3, %c0_4] : memref<1x128xf32, #tpu.memory_space<vmem>>, vector<1x128xf32>
    %4 = vector.broadcast %3 : vector<1x128xf32> to vector<8x128xf32>
    %5 = arith.addf %2, %4 : vector<8x128xf32>
    %cst_5 = arith.constant 0.000000e+00 : f32
    %6 = vector.broadcast %cst_5 : f32 to vector<8x128xf32>
    %7 = arith.maximumf %5, %6 : vector<8x128xf32>
    %c0_6 = arith.constant 0 : index
    %c0_7 = arith.constant 0 : index
    %8 = vector.load %arg5[%c0_6, %c0_7] : memref<8x128xf32, #tpu.memory_space<vmem>>, vector<8x128xf32>
    tpu.vector_store %arg5[%c0_6, %c0_7], %7 {strides = array<i32>} : memref<8x128xf32, #tpu.memory_space<vmem>>, vector<8x128xf32>,
    return
  }
  func.func @transform_0(%arg0: i32, %arg1: i32) -> (i32, i32) {
    %c0_i32 = arith.constant 0 : i32
    %c0_i32_0 = arith.constant 0 : i32
    return %arg0, %c0_i32 : i32, i32
  }
  func.func @transform_1(%arg0: i32, %arg1: i32) -> (i32, i32) {
    %c0_i32 = arith.constant 0 : i32
    %c0_i32_0 = arith.constant 0 : i32
    return %c0_i32, %arg1 : i32, i32
  }
  func.func @transform_2(%arg0: i32, %arg1: i32) -> (i32, i32) {
    %c0_i32 = arith.constant 0 : i32
    %c0_i32_0 = arith.constant 0 : i32
    return %c0_i32, %arg1 : i32, i32
  }
  func.func @transform_3(%arg0: i32, %arg1: i32) -> (i32, i32) {
    %c0_i32 = arith.constant 0 : i32
    return %arg0, %arg1 : i32, i32
  }
}

</mosaic_0001>

<llo_original>
// kernel: tpu_custom_call.1
$region0: #{tpu_custom_call.1}
  #allocation0 [shape = 'u32[]', space=smem, size = 0x4, offset = 0x4, fixed_abs, tag = 'smem constant byte address 0x4 - core index']
  #allocation1 [shape = 'u32[72,128]{1,0:T(1,128)}', space=vmem, size = 0x9000, scoped, tag = 'internal scratch']
  %s0 = inlined_call_operand.hbm [shape: bf16[40,128], index: 0, kind: input, shape index: {}]
  %s1 = inlined_call_operand.hbm [shape: bf16[128,128], index: 1, kind: input, shape index: {}]
  %s2 = inlined_call_operand.vmem [shape: f32[1,128], index: 2, kind: input, shape index: {}]
  %s3 = inlined_call_operand.hbm [shape: f32[40,128], index: 3, kind: output, shape index: {}]
  %s4 = sld [smem:[#allocation0]]
  $region53: #{tpu_custom_call.1} parent=0
    _
  %s6 = ssub.s32 1, %s4
  %s7 = scalar_select 0, %s6, %s4
  $region1: #{tpu_custom_call.1} parent=0
    #allocation2 [shape = 'u8[4096]{0}', space=vmem, size = 0x1000, scoped, tag = 'input window, operand 0']
    #allocation3 [shape = 's32[2]{0}', space=sflag, size = 0x8, scoped, tag = 'scoped memory for tpu_custom_call.1']
    #allocation4 [shape = 's32[2]{0}', space=sflag, size = 0x8, scoped, tag = 'scoped memory for tpu_custom_call.1']
    #allocation5 [shape = 'u8[32768]{0}', space=vmem, size = 0x8000, scoped, tag = 'input window, operand 1, single buffered']
    #allocation6 [shape = 's32[1]{0}', space=sflag, size = 0x4, scoped, tag = 'scoped memory for tpu_custom_call.1']
    #allocation7 [shape = 'u8[8192]{0}', space=vmem, size = 0x2000, scoped, tag = 'output window, operand 0']
    %8 = vsyncpa [#allocation3], 0
    %s9 = scalar_lea.sflag [#allocation3], 1
    %10 = vsyncpa %s9, 0
    %11 = vsyncpa [#allocation6], 0
    %12 = vsyncpa [#allocation4], 0
    %s13 = scalar_lea.sflag [#allocation4], 1
    %14 = vsyncpa %s13, 0
    loop: start=0, step=1, limit=7
    $region2: #{tpu_custom_call.1} parent=1 // loop_pre_header
      _
    $region3: #{tpu_custom_call.1} parent=1 // loop_header
      %s16 = sphi 0, %s20
      %p17 = scmp.ge.s32.totalorder %s16, 7
      %s23 = sphi 0, %s35
      %s24 = sphi 0, %s31
      %s25 = sphi 0, %s23
      %s26 = sphi 0, %s24
      %s27 = sphi 0, %s25
      %s28 = sphi 0, %s26
      %s38 = sphi 0, %s40
      %s41 = sphi 0, %s38
      %s42 = sphi 0, %s41
      %s58 = sphi 0, %s42
      %s64 = sphi 0, %s66
      %s67 = sphi 0, %s64
      %s68 = sphi 0, %s67
      %s84 = sphi 0, %s68
      %s90 = sphi 0, %s92
      %s93 = sphi 0, %s90
      %s94 = sphi 0, %s93
      %s110 = sphi 0, %s94
      %s118 = sphi 0, %s120
      %s121 = sphi 0, %s118
      %s122 = sphi 0, %s121
      %s138 = sphi 0, %s122
    $region4: #{tpu_custom_call.1} parent=1 // loop_header_branch
      %19 = sbr.rel (%p17) target = $region8
    $region5: #{tpu_custom_call.1} parent=1 // loop_body
      %s21 = ssub.s32 %s16, 1
      %s22 = ssub.s32 %s16, 2
      %s29 = sadd.s32 1, %s24
      %p30 = scmp.ge.s32.totalorder %s29, 1
      %s31 = scalar_select %p30, 0, %s29
      %s32 = sadd.s32 1, %s23
      %s33 = scalar_select %p30, %s32, %s23
      %p34 = scmp.ge.s32.totalorder %s33, 5
      %s35 = scalar_select %p34, 0, %s33
      %s36 = ssub.s32 %s23, %s35
      %p37 = scmp.eq.s32.totalorder %s36, 0
      %s39 = sadd.s32 %s38, 1
      %s40 = scalar_select %p37, %s38, %s39
      %p43 = pneg %p37
      %p44 = scmp.eq.s32.totalorder %s16, 4
      %p45 = por %p43, %p44
      %p46 = scmp.ne.s32.totalorder %s38, %s41
      %p47 = scmp.eq.s32.totalorder %s16, 0
      %p48 = por %p46, %p47
      %p49 = scmp.ne.s32.totalorder %s38, %s41
      %p50 = scmp.eq.s32.totalorder %s21, 4
      %p51 = por %p49, %p50
      %p52 = scmp.ne.s32.totalorder %s41, %s42
      %p53 = scmp.eq.s32.totalorder %s21, 0
      %p54 = por %p52, %p53
      %p55 = scmp.ne.s32.totalorder %s41, %s42
      %p56 = scmp.eq.s32.totalorder %s22, 4
      %p57 = por %p55, %p56
      %p59 = scmp.ne.s32.totalorder %s42, %s58
      %p60 = scmp.eq.s32.totalorder %s22, 0
      %p61 = por %p59, %p60
      %s62 = ssub.s32 %s24, %s31
      %p63 = scmp.eq.s32.totalorder %s62, 0
      %s65 = sadd.s32 %s64, 1
      %s66 = scalar_select %p63, %s64, %s65
      %p69 = pneg %p63
      %p70 = scmp.eq.s32.totalorder %s16, 4
      %p71 = por %p69, %p70
      %p72 = scmp.ne.s32.totalorder %s64, %s67
      %p73 = scmp.eq.s32.totalorder %s16, 0
      %p74 = por %p72, %p73
      %p75 = scmp.ne.s32.totalorder %s64, %s67
      %p76 = scmp.eq.s32.totalorder %s21, 4
      %p77 = por %p75, %p76
      %p78 = scmp.ne.s32.totalorder %s67, %s68
      %p79 = scmp.eq.s32.totalorder %s21, 0
      %p80 = por %p78, %p79
      %p81 = scmp.ne.s32.totalorder %s67, %s68
      %p82 = scmp.eq.s32.totalorder %s22, 4
      %p83 = por %p81, %p82
      %p85 = scmp.ne.s32.totalorder %s68, %s84
      %p86 = scmp.eq.s32.totalorder %s22, 0
      %p87 = por %p85, %p86
      %s88 = ssub.s32 %s24, %s31
      %p89 = scmp.eq.s32.totalorder %s88, 0
      %s91 = sadd.s32 %s90, 1
      %s92 = scalar_select %p89, %s90, %s91
      %p95 = pneg %p89
      %p96 = scmp.eq.s32.totalorder %s16, 4
      %p97 = por %p95, %p96
      %p98 = scmp.ne.s32.totalorder %s90, %s93
      %p99 = scmp.eq.s32.totalorder %s16, 0
      %p100 = por %p98, %p99
      %p101 = scmp.ne.s32.totalorder %s90, %s93
      %p102 = scmp.eq.s32.totalorder %s21, 4
      %p103 = por %p101, %p102
      %p104 = scmp.ne.s32.totalorder %s93, %s94
      %p105 = scmp.eq.s32.totalorder %s21, 0
      %p106 = por %p104, %p105
      %p107 = scmp.ne.s32.totalorder %s93, %s94
      %p108 = scmp.eq.s32.totalorder %s22, 4
      %p109 = por %p107, %p108
      %p111 = scmp.ne.s32.totalorder %s94, %s110
      %p112 = scmp.eq.s32.totalorder %s22, 0
      %p113 = por %p111, %p112
      %s114 = ssub.s32 %s23, %s35
      %s115 = ssub.s32 %s24, %s31
      %s116 = sor.u32 %s114, %s115
      %p117 = scmp.eq.s32.totalorder %s116, 0
      %s119 = sadd.s32 %s118, 1
      %s120 = scalar_select %p117, %s118, %s119
      %p123 = pneg %p117
      %p124 = scmp.eq.s32.totalorder %s16, 4
      %p125 = por %p123, %p124
      %p126 = scmp.ne.s32.totalorder %s118, %s121
      %p127 = scmp.eq.s32.totalorder %s16, 0
      %p128 = por %p126, %p127
      %p129 = scmp.ne.s32.totalorder %s118, %s121
      %p130 = scmp.eq.s32.totalorder %s21, 4
      %p131 = por %p129, %p130
      %p132 = scmp.ne.s32.totalorder %s121, %s122
      %p133 = scmp.eq.s32.totalorder %s21, 0
      %p134 = por %p132, %p133
      %p135 = scmp.ne.s32.totalorder %s121, %s122
      %p136 = scmp.eq.s32.totalorder %s22, 4
      %p137 = por %p135, %p136
      %p139 = scmp.ne.s32.totalorder %s122, %s138
      %p140 = scmp.eq.s32.totalorder %s22, 0
      %p141 = por %p139, %p140
      %p142 = scmp.le.s32.totalorder 1, %s16
      %p143 = scmp.lt.s32.totalorder %s16, 6
      %p144 = pnand %p142, %p143
      %p145 = pneg %p144
      // Predicated region
      $region9: #{tpu_custom_call.1} parent=5 // pred_check
        _
      $region10: #{tpu_custom_call.1} parent=5 // pred_check_branch
        %147 = sbr.rel (%p144) target = $region12
      $region11: #{tpu_custom_call.1} parent=5 // pred_region
        %s148 = ssub.s32 %s16, 1
        // Predicated region
        $region13: #{tpu_custom_call.1} parent=11 // pred_check
          %p149 = pneg %p80
        $region14: #{tpu_custom_call.1} parent=11 // pred_check_branch
          %151 = sbr.rel (%p149) target = $region16
        $region15: #{tpu_custom_call.1} parent=11 // pred_region
          %153 = vsyncadd [#allocation6], 0
          %s154 = smul.addr %s26, 4
          %s155 = scalar_lea.hbm %s1, %s154
          %s156 = sshll.u32 %s155, 4
          %s157 = int_to_ptr.hbm [resolvable:$true] %s156
          %s158 = sshll.u32 [#allocation5], 4
          %s159 = int_to_ptr.vmem [resolvable:$true] %s158
          %164 = dma.hbm_to_vmem [thread:$0]  %s157, 1024, %s159, [#allocation6], 64, 64, 4
        $region16: #{tpu_custom_call.1} parent=11 // pred_fallthru
          _
        // Predicated region
        $region17: #{tpu_custom_call.1} parent=11 // pred_check
          %p165 = pneg %p106
        $region18: #{tpu_custom_call.1} parent=11 // pred_check_branch
          %167 = sbr.rel (%p165) target = $region20
        $region19: #{tpu_custom_call.1} parent=11 // pred_region
          %p168 = scmp.lt.s32.totalorder %s26, 0
          %s169 = scalar_select %p168, %s26, 0
          %s170 = scalar_lea.vmem %s2, %s169
        $region20: #{tpu_custom_call.1} parent=11 // pred_fallthru
          _
      $region12: #{tpu_custom_call.1} parent=5 // pred_fallthru
        _
      %p171 = scmp.lt.s32.totalorder %s16, 5
      // Predicated region
      $region21: #{tpu_custom_call.1} parent=5 // pred_check
        %p172 = pneg %p171
      $region22: #{tpu_custom_call.1} parent=5 // pred_check_branch
        %174 = sbr.rel (%p172) target = $region24
      $region23: #{tpu_custom_call.1} parent=5 // pred_region
        // Predicated region
        $region25: #{tpu_custom_call.1} parent=23 // pred_check
          %p175 = pneg %p48
        $region26: #{tpu_custom_call.1} parent=23 // pred_check_branch
          %177 = sbr.rel (%p175) target = $region28
        $region27: #{tpu_custom_call.1} parent=23 // pred_region
          %s178 = sand.u32 %s38, 1
          %s179 = scalar_lea.sflag [#allocation3], %s178
          %s180 = sand.u32 %s38, 1
          %s181 = smul.addr %s180, 4
          %s182 = scalar_lea.vmem [#allocation2], %s181
          %184 = vsyncadd %s179, 0
          %s185 = smul.addr %s23, 4
          %s186 = scalar_lea.hbm %s0, %s185
          %s188 = sshll.u32 %s186, 4
          %s189 = int_to_ptr.hbm [resolvable:$true] %s188
          %s190 = sshll.u32 %s182, 4
          %s191 = int_to_ptr.vmem [resolvable:$true] %s190
          %193 = dma.hbm_to_vmem [thread:$0]  %s189, 64, %s191, %s179
        $region28: #{tpu_custom_call.1} parent=23 // pred_fallthru
          _
      $region24: #{tpu_custom_call.1} parent=5 // pred_fallthru
        _
      %p194 = scmp.le.s32.totalorder 1, %s16
      %p195 = scmp.lt.s32.totalorder %s16, 6
      %p196 = pnand %p194, %p195
      %p197 = pneg %p196
      // Predicated region
      $region29: #{tpu_custom_call.1} parent=5 // pred_check
        _
      $region30: #{tpu_custom_call.1} parent=5 // pred_check_branch
        %199 = sbr.rel (%p196) target = $region32
      $region31: #{tpu_custom_call.1} parent=5 // pred_region
        %s200 = ssub.s32 %s16, 1
        %s201 = sand.u32 %s41, 1
        %s202 = scalar_lea.sflag [#allocation3], %s201
        %s203 = sand.u32 %s41, 1
        %s204 = smul.addr %s203, 4
        %s205 = scalar_lea.vmem [#allocation2], %s204
        // Predicated region
        $region33: #{tpu_custom_call.1} parent=31 // pred_check
          %p206 = pneg %p54
        $region34: #{tpu_custom_call.1} parent=31 // pred_check_branch
          %208 = sbr.rel (%p206) target = $region36
        $region35: #{tpu_custom_call.1} parent=31 // pred_region
          %210 = dma.done %s202, 64
        $region36: #{tpu_custom_call.1} parent=31 // pred_fallthru
          _
        // Predicated region
        $region37: #{tpu_custom_call.1} parent=31 // pred_check
          %p211 = pneg %p80
        $region38: #{tpu_custom_call.1} parent=31 // pred_check_branch
          %213 = sbr.rel (%p211) target = $region40
        $region39: #{tpu_custom_call.1} parent=31 // pred_region
          %215 = dma.done [#allocation6], 1024
        $region40: #{tpu_custom_call.1} parent=31 // pred_fallthru
          _
        %s216 = sand.u32 %s41, 1
        %s217 = scalar_lea.sflag [#allocation3], %s216
        %s218 = sand.u32 %s41, 1
        %s219 = smul.addr %s218, 4
        %s220 = scalar_lea.vmem [#allocation2], %s219
        %p221 = pneg %p54
        %p222 = pneg %p51
        %p223 = pneg %p80
        %p224 = pneg %p77
        %p225 = scmp.lt.s32.totalorder %s26, 0
        %s226 = scalar_select %p225, %s26, 0
        %s227 = scalar_lea.vmem %s2, %s226
        %p228 = pneg %p106
        %p229 = pneg %p103
        %p230 = pneg %p134
        %p231 = pneg %p131
        %s232 = sand.u32 %s121, 1
        %s233 = scalar_lea.sflag [#allocation4], %s232
        %s234 = sand.u32 %s121, 1
        %s235 = smul.addr %s234, 8
        %s236 = scalar_lea.vmem [#allocation7], %s235
        %p237 = scmp.lt.s32.totalorder %s26, 0
        %s238 = scalar_select %p237, %s26, 0
        %s239 = scalar_lea.vmem %s2, %s238
        %v240 = vld [vmem:[%s205] sm:$0xf]
        %v241 = vld [vmem:[#allocation5] sm:$0xf]
        %v242 = vld [vmem:[#allocation5 + $0x4] sm:$0xf]
        %v243 = vld [vmem:[#allocation5 + $0x8] sm:$0xf]
        %v244 = vld [vmem:[#allocation5 + $0xc] sm:$0xf]
        %v245 = vld [vmem:[#allocation5 + $0x10] sm:$0xf]
        %v246 = vld [vmem:[#allocation5 + $0x14] sm:$0xf]
        %v247 = vld [vmem:[#allocation5 + $0x18] sm:$0xf]
        %v248 = vld [vmem:[#allocation5 + $0x1c] sm:$0xf]
        %v249 = vld [vmem:[#allocation5 + $0x20] sm:$0xf]
        %v250 = vld [vmem:[#allocation5 + $0x24] sm:$0xf]
        %v251 = vld [vmem:[#allocation5 + $0x28] sm:$0xf]
        %v252 = vld [vmem:[#allocation5 + $0x2c] sm:$0xf]
        %v253 = vld [vmem:[#allocation5 + $0x30] sm:$0xf]
        %v254 = vld [vmem:[#allocation5 + $0x34] sm:$0xf]
        %v255 = vld [vmem:[#allocation5 + $0x38] sm:$0xf]
        %v256 = vld [vmem:[#allocation5 + $0x3c] sm:$0xf]
        %v257 = vld [vmem:[%s239] sm:$0x1]
        %v259 = vperm.slane %v257, 0
        %v277 = vunpack.c.l.b16 %v241
        %v278 = vunpack.c.l.b16 %v242
        %v279 = vunpack.c.l.b16 %v243
        %v280 = vunpack.c.l.b16 %v244
        %v281 = vunpack.c.l.b16 %v245
        %v282 = vunpack.c.l.b16 %v246
        %v283 = vunpack.c.l.b16 %v247
        %v284 = vunpack.c.l.b16 %v248
        %v285 = vunpack.c.l.b16 %v249
        %v286 = vunpack.c.l.b16 %v250
        %v287 = vunpack.c.l.b16 %v251
        %v288 = vunpack.c.l.b16 %v252
        %v289 = vunpack.c.l.b16 %v253
        %v290 = vunpack.c.l.b16 %v254
        %v291 = vunpack.c.l.b16 %v255
        %v292 = vunpack.c.l.b16 %v256
        %v293 = vpack.c.b16 %v278, %v277
        %v294 = vpack.c.b16 %v280, %v279
        %v295 = vpack.c.b16 %v282, %v281
        %v296 = vpack.c.b16 %v284, %v283
        %v297 = vpack.c.b16 %v286, %v285
        %v298 = vpack.c.b16 %v288, %v287
        %v299 = vpack.c.b16 %v290, %v289
        %v300 = vpack.c.b16 %v292, %v291
        %309 = vmatpush.bf16.msra.mxu0 %v300
        %310 = vmatpush.bf16.msra.mxu0 %v299
        %311 = vmatpush.bf16.msra.mxu0 %v298
        %312 = vmatpush.bf16.msra.mxu0 %v297
        %313 = vmatpush.bf16.msra.mxu0 %v296
        %314 = vmatpush.bf16.msra.mxu0 %v295
        %315 = vmatpush.bf16.msra.mxu0 %v294
        %316 = vmatpush.bf16.msra.mxu0 %v293
        %317 = vmatmul.bf16.gmra.mxu0 %v240
        %v318 = vpop.f32.mrf.mxu0
        %v319 = vadd.f32 %v259, %v318
        %v320 = vpop.f32.mrf.mxu0
        %321 = vdwg.mxu0
        %v322 = vmax.f32 %v319, 0.0
        %323 = vst [vmem:[%s236] sm:$0xff] %v322
        %s324 = sand.u32 %s121, 1
        %s325 = scalar_lea.sflag [#allocation4], %s324
        %s326 = sand.u32 %s121, 1
        %s327 = smul.addr %s326, 8
        %s328 = scalar_lea.vmem [#allocation7], %s327
        // Predicated region
        $region41: #{tpu_custom_call.1} parent=31 // pred_check
          %p329 = pneg %p131
        $region42: #{tpu_custom_call.1} parent=31 // pred_check_branch
          %331 = sbr.rel (%p329) target = $region44
        $region43: #{tpu_custom_call.1} parent=31 // pred_region
          %333 = vsyncadd %s325, 0
          %s334 = sadd.s32 %s26, %s25
          %s335 = smul.addr %s334, 8
          %s336 = scalar_lea.hbm %s3, %s335
          %s338 = sshll.u32 %s328, 4
          %s339 = int_to_ptr.vmem [resolvable:$true] %s338
          %s340 = sshll.u32 %s336, 4
          %s341 = int_to_ptr.hbm [resolvable:$true] %s340
          %343 = dma.vmem_to_hbm [thread:$0]  %s339, 128, %s341, %s325
        $region44: #{tpu_custom_call.1} parent=31 // pred_fallthru
          _
      $region32: #{tpu_custom_call.1} parent=5 // pred_fallthru
        _
      %p344 = scmp.le.s32.totalorder 2, %s16
      // Predicated region
      $region45: #{tpu_custom_call.1} parent=5 // pred_check
        %p345 = pneg %p344
      $region46: #{tpu_custom_call.1} parent=5 // pred_check_branch
        %347 = sbr.rel (%p345) target = $region48
      $region47: #{tpu_custom_call.1} parent=5 // pred_region
        %s348 = ssub.s32 %s16, 2
        // Predicated region
        $region49: #{tpu_custom_call.1} parent=47 // pred_check
          %p349 = pneg %p137
        $region50: #{tpu_custom_call.1} parent=47 // pred_check_branch
          %351 = sbr.rel (%p349) target = $region52
        $region51: #{tpu_custom_call.1} parent=47 // pred_region
          %s352 = sand.u32 %s122, 1
          %s353 = scalar_lea.sflag [#allocation4], %s352
          %s354 = sand.u32 %s122, 1
          %s355 = smul.addr %s354, 8
          %s356 = scalar_lea.vmem [#allocation7], %s355
          %358 = dma.done %s353, 128
        $region52: #{tpu_custom_call.1} parent=47 // pred_fallthru
          _
      $region48: #{tpu_custom_call.1} parent=5 // pred_fallthru
        _
    $region6: #{tpu_custom_call.1} parent=1 // loop_footer
      %s20 = sadd.s32 1, %s16
    $region7: #{tpu_custom_call.1} parent=1 // loop_footer_branch
      %15 = sbr.rel target = $region3
    $region8: #{tpu_custom_call.1} parent=1 // loop_exit
      _
    %359 = vsyncpa [#allocation3], 1
    %s360 = scalar_lea.sflag [#allocation3], 1
    %361 = vsyncpa %s360, 1
    %362 = vsyncpa [#allocation6], 1
    %363 = vsyncpa [#allocation4], 1
    %s364 = scalar_lea.sflag [#allocation4], 1
    %365 = vsyncpa %s364, 1

</llo_original>
